<compile_context>
chip_gen: v6e
topology: v6e:2x2x1
jax: 0.10.0
libtpu: 0.0.40
codegen_flags: <defaults>
</compile_context>

<pallas_src>
import math

import jax
import jax.numpy as jnp
from jax.experimental import pallas as pl
from jax.experimental.pallas import tpu as pltpu


def _round_up(x, m):
    return (x + m - 1) // m * m


# ----------------------------------------------------------------------------
# Kernel 1: LoRA mid projection  mid = x @ A^T      (grid: M tiles x K tiles)
# ----------------------------------------------------------------------------
def _lora_mid_kernel(x_ref, aT_ref, mid_ref, acc_ref):
    k = pl.program_id(1)

    @pl.when(k == 0)
    def _():
        acc_ref[...] = jnp.zeros_like(acc_ref)

    acc_ref[...] += jnp.dot(x_ref[...], aT_ref[...],
                            preferred_element_type=jnp.float32)

    @pl.when(k == pl.num_programs(1) - 1)
    def _():
        mid_ref[...] = acc_ref[...].astype(mid_ref.dtype)


# ----------------------------------------------------------------------------
# Kernel 2: main GEMM + epilogue  out = x @ W^T + bias + mid @ (scaling * B^T)
#           (grid: M tiles x N tiles x K tiles, K innermost reduction)
# ----------------------------------------------------------------------------
def _lora_linear_kernel(x_ref, wT_ref, b_ref, mid_ref, bT_ref, o_ref, acc_ref):
    k = pl.program_id(2)

    @pl.when(k == 0)
    def _():
        acc_ref[...] = jnp.zeros_like(acc_ref)

    acc_ref[...] += jnp.dot(x_ref[...], wT_ref[...],
                            preferred_element_type=jnp.float32)          # (tm, tn) fp32

    @pl.when(k == pl.num_programs(2) - 1)
    def _():
        # scaling already folded into bT at prep time.
        lora = jnp.dot(mid_ref[...], bT_ref[...],
                       preferred_element_type=jnp.float32)               # (tm, tn) fp32
        o_ref[...] = (acc_ref[...] + b_ref[...] + lora).astype(o_ref.dtype)


# ----------------------------------------------------------------------------
# One-time parameter preparation (transpose / pad / cast / fold scaling).
# ----------------------------------------------------------------------------
def prepare_lora_linear_params(weight, bias, lora_A, lora_B, *, lora_alpha, r,
                               tn=512, tk=1024, compute_dtype=jnp.bfloat16):
    """weight: (out, in)   lora_A: (r, in)   lora_B: (out, r)   bias: (out,) or None."""
    out_features, in_features = weight.shape
    scaling = float(lora_alpha) / float(r)
    cdt = compute_dtype

    # Lane-dense, 128-aligned tiles; clamp to the (padded) problem size for tiny layers.
    tn = min(tn, _round_up(out_features, 128))
    tk = min(tk, _round_up(in_features, 128))
    n_pad = _round_up(out_features, tn)
    k_pad = _round_up(in_features, tk)
    r_pad = _round_up(max(r, 1), 128)

    if bias is None:
        bias = jnp.zeros((out_features,), jnp.float32)

    wT = jnp.pad(weight.T.astype(cdt),
                 ((0, k_pad - in_features), (0, n_pad - out_features)))        # (K_pad, N_pad)
    aT = jnp.pad(lora_A.T.astype(cdt),
                 ((0, k_pad - in_features), (0, r_pad - r)))                   # (K_pad, r_pad)
    bT = jnp.pad((lora_B.T * scaling).astype(cdt),
                 ((0, r_pad - r), (0, n_pad - out_features)))                  # (r_pad, N_pad)
    b2d = jnp.pad(bias.astype(jnp.float32).reshape(1, out_features),
                  ((0, 0), (0, n_pad - out_features)))                         # (1, N_pad)

    return dict(wT=wT, aT=aT, bT=bT, bias=b2d,
                in_features=in_features, out_features=out_features,
                tn=tn, tk=tk, r_pad=r_pad, compute_dtype=cdt)


def _vmem_limit_bytes(tm, tn, tk, r_pad, cdt, out_dtype):
    eb = jnp.dtype(cdt).itemsize
    ob = jnp.dtype(out_dtype).itemsize
    # double-buffered inputs + output, fp32 accumulator scratch
    inputs = 2 * (tm * tk + tk * tn + tm * r_pad + r_pad * tn) * eb + 2 * tn * 4
    outputs = 2 * tm * tn * ob
    acc = tm * tn * 4
    est = inputs + outputs + acc
    return int(min(64 * 1024 * 1024, max(32 * 1024 * 1024, 2 * est)))


# ----------------------------------------------------------------------------
# Forward wrapper.
# ----------------------------------------------------------------------------
def lora_linear(x, params, *, tm=512, out_dtype=None):
    """x: (..., in_features) -> (..., out_features)."""
    # TODO(synk): lora_dropout > 0 (training-mode dropout) not implemented; the module
    # default p=0.0 is the identity, which is what this kernel computes.
    in_features = params["in_features"]
    out_features = params["out_features"]
    tn, tk, r_pad = params["tn"], params["tk"], params["r_pad"]
    cdt = params["compute_dtype"]
    wT, aT, bT, b2d = params["wT"], params["aT"], params["bT"], params["bias"]
    k_pad, n_pad = wT.shape

    assert x.shape[-1] == in_features
    lead = x.shape[:-1]
    M = int(math.prod(lead)) if lead else 1
    out_dtype = out_dtype if out_dtype is not None else x.dtype

    tm = min(tm, _round_up(M, 128))
    m_pad = _round_up(M, tm)

    x2d = x.reshape(M, in_features).astype(cdt)
    if m_pad != M or k_pad != in_features:
        x_p = jnp.pad(x2d, ((0, m_pad - M), (0, k_pad - in_features)))
    else:
        x_p = x2d

    # ---- Pass 1: mid = x @ A^T  (tiny: (m_pad, r_pad)) -----------------------
    mid = pl.pallas_call(
        _lora_mid_kernel,
        out_shape=jax.ShapeDtypeStruct((m_pad, r_pad), cdt),
        grid_spec=pltpu.PrefetchScalarGridSpec(
            num_scalar_prefetch=0,
            grid=(m_pad // tm, k_pad // tk),
            in_specs=[
                pl.BlockSpec((tm, tk), lambda i, k: (i, k)),       # x tile
                pl.BlockSpec((tk, r_pad), lambda i, k: (k, 0)),    # A^T tile
            ],
            out_specs=pl.BlockSpec((tm, r_pad), lambda i, k: (i, 0)),
            scratch_shapes=[pltpu.VMEM((tm, r_pad), jnp.float32)],
        ),
        compiler_params=pltpu.CompilerParams(
            dimension_semantics=("parallel", "arbitrary"),
        ),
    )(x_p, aT)

    # ---- Pass 2: main GEMM + bias + LoRA epilogue ----------------------------
    grid = (m_pad // tm, n_pad // tn, k_pad // tk)

    out_p = pl.pallas_call(
        _lora_linear_kernel,
        out_shape=jax.ShapeDtypeStruct((m_pad, n_pad), out_dtype),
        grid_spec=pltpu.PrefetchScalarGridSpec(
            num_scalar_prefetch=0,
            grid=grid,
            in_specs=[
                pl.BlockSpec((tm, tk), lambda i, j, k: (i, k)),        # x tile
                pl.BlockSpec((tk, tn), lambda i, j, k: (k, j)),        # W^T tile
                pl.BlockSpec((1, tn), lambda i, j, k: (0, j)),         # bias tile (fp32)
                pl.BlockSpec((tm, r_pad), lambda i, j, k: (i, 0)),     # mid tile (precomputed)
                pl.BlockSpec((r_pad, tn), lambda i, j, k: (0, j)),     # (B^T * scaling) tile
            ],
            out_specs=pl.BlockSpec((tm, tn), lambda i, j, k: (i, j)),
            scratch_shapes=[pltpu.VMEM((tm, tn), jnp.float32)],
        ),
        compiler_params=pltpu.CompilerParams(
            # mid is now an ordinary input -> j can be parallel (2 TCs on v7x);
            # k is the reduction axis.
            dimension_semantics=("parallel", "parallel", "arbitrary"),
            vmem_limit_bytes=_vmem_limit_bytes(tm, tn, tk, r_pad, cdt, out_dtype),
        ),
    )(x_p, wT, b2d, mid, bT)

    if m_pad != M or n_pad != out_features:
        out_p = out_p[:M, :out_features]
    return out_p.reshape(*lead, out_features)


def _kaiming_uniform(key, shape, a=math.sqrt(5)):
    # Matches torch.nn.init.kaiming_uniform_ for a 2D tensor (fan_in = shape[1]).
    fan_in = shape[1]
    gain = math.sqrt(2.0 / (1.0 + a * a))
    bound = gain * math.sqrt(3.0 / fan_in)
    return jax.random.uniform(key, shape, jnp.float32, -bound, bound)


if __name__ == "__main__":
    batch, seq = 2, 8
    in_features, out_features = 32, 24
    r, lora_alpha = 4, 8

    key = jax.random.PRNGKey(0)
    kx, kw, kb, ka, kbb = jax.random.split(key, 5)

    x = jax.random.normal(kx, (batch, seq, in_features), jnp.float32)

    # Base nn.Linear parameters (deterministic synthetic init).
    weight = _kaiming_uniform(kw, (out_features, in_features))            # (out, in)
    bias_bound = 1.0 / math.sqrt(in_features)
    bias = jax.random.uniform(kb, (out_features,), jnp.float32,
                              -bias_bound, bias_bound)

    # LoRA parameters per reset_parameters_lora (zero_init=False so the LoRA path is live).
    lora_A = _kaiming_uniform(ka, (r, in_features))                       # (r, in)
    lora_B = _kaiming_uniform(kbb, (out_features, r))                     # (out, r)

    # Pure-JAX reference for correctness.
    scaling = lora_alpha / r
    ref = (x @ weight.T + bias) + (x @ lora_A.T) @ lora_B.T * scaling

    # fp32-operand path (tight tolerance).
    params_f32 = prepare_lora_linear_params(weight, bias, lora_A, lora_B,
                                            lora_alpha=lora_alpha, r=r,
                                            compute_dtype=jnp.float32)
    out_f32 = jax.block_until_ready(lora_linear(x, params_f32))
    assert out_f32.shape == (batch, seq, out_features)
    assert jnp.allclose(out_f32, ref, atol=1e-4, rtol=1e-4), "fp32 mismatch vs reference"

    # Default bf16 MXU-operand path with fp32 accumulation (loose tolerance).
    params_bf16 = prepare_lora_linear_params(weight, bias, lora_A, lora_B,
                                             lora_alpha=lora_alpha, r=r)
    out_bf16 = jax.block_until_ready(lora_linear(x, params_bf16))
    assert out_bf16.shape == (batch, seq, out_features)
    assert jnp.allclose(out_bf16, ref, atol=5e-2, rtol=5e-2), "bf16 mismatch vs reference"

    print("KERNEL_OK")
</pallas_src>

<mosaic_0001>
module attributes {stable_mosaic.version = 11 : i64} {
  func.func @_lora_mid_kernel(%arg0: i32, %arg1: i32, %arg2: memref<128x128xf32, #tpu.memory_space<vmem>>, %arg3: memref<128x128xf32, #tpu.memory_space<vmem>>, %arg4: memref<128x128xf32, #tpu.memory_space<vmem>>, %arg5: memref<128x128xf32, #tpu.memory_space<vmem>>) attributes {dimension_semantics = [#tpu.dimension_semantics<parallel>, #tpu.dimension_semantics<arbitrary>], iteration_bounds = array<i64: 1, 1>, scalar_prefetch = 0 : i64, scratch_operands = 1 : i64, tpu.core_type = #tpu.core_type<tc>, window_params = [{transform_indices = @transform_0, window_bounds = array<i64: 128, 128>}, {transform_indices = @transform_1, window_bounds = array<i64: 128, 128>}, {transform_indices = @transform_2, window_bounds = array<i64: 128, 128>}]} {
    %c0_i32 = arith.constant 0 : i32
    %0 = arith.cmpi eq, %arg1, %c0_i32 : i32
    %1 = arith.extui %0 : i1 to i32
    %c0_i32_0 = arith.constant 0 : i32
    %2 = arith.cmpi ne, %1, %c0_i32_0 : i32
    scf.if %2 {
      %cst_10 = arith.constant 0.000000e+00 : f32
      %12 = vector.broadcast %cst_10 : f32 to vector<128x128xf32>
      %c0_11 = arith.constant 0 : index
      %c0_12 = arith.constant 0 : index
      %13 = vector.load %arg5[%c0_11, %c0_12] : memref<128x128xf32, #tpu.memory_space<vmem>>, vector<128x128xf32>
      tpu.vector_store %arg5[%c0_11, %c0_12], %12 {strides = array<i32>} : memref<128x128xf32, #tpu.memory_space<vmem>>, vector<128x128xf32>,
    } else {
    }
    %c0 = arith.constant 0 : index
    %c0_1 = arith.constant 0 : index
    %3 = vector.load %arg5[%c0, %c0_1] : memref<128x128xf32, #tpu.memory_space<vmem>>, vector<128x128xf32>
    %c0_2 = arith.constant 0 : index
    %c0_3 = arith.constant 0 : index
    %4 = vector.load %arg2[%c0_2, %c0_3] : memref<128x128xf32, #tpu.memory_space<vmem>>, vector<128x128xf32>
    %c0_4 = arith.constant 0 : index
    %c0_5 = arith.constant 0 : index
    %5 = vector.load %arg3[%c0_4, %c0_5] : memref<128x128xf32, #tpu.memory_space<vmem>>, vector<128x128xf32>
    %cst = arith.constant dense<0.000000e+00> : vector<128x128xf32>
    %6 = tpu.matmul %4, %5, %cst {dimension_numbers = #tpu.dot_dimension_numbers<[1], [0], [0], [1], [0, 0, 1, 1], [], []>} : vector<128x128xf32>, vector<128x128xf32>, vector<128x128xf32> -> vector<128x128xf32>
    %7 = arith.addf %3, %6 : vector<128x128xf32>
    %c0_6 = arith.constant 0 : index
    %c0_7 = arith.constant 0 : index
    %8 = vector.load %arg5[%c0_6, %c0_7] : memref<128x128xf32, #tpu.memory_space<vmem>>, vector<128x128xf32>
    tpu.vector_store %arg5[%c0_6, %c0_7], %7 {strides = array<i32>} : memref<128x128xf32, #tpu.memory_space<vmem>>, vector<128x128xf32>,
    %c0_i32_8 = arith.constant 0 : i32
    %9 = arith.cmpi eq, %arg1, %c0_i32_8 : i32
    %10 = arith.extui %9 : i1 to i32
    %c0_i32_9 = arith.constant 0 : i32
    %11 = arith.cmpi ne, %10, %c0_i32_9 : i32
    scf.if %11 {
      %c0_10 = arith.constant 0 : index
      %c0_11 = arith.constant 0 : index
      %12 = vector.load %arg5[%c0_10, %c0_11] : memref<128x128xf32, #tpu.memory_space<vmem>>, vector<128x128xf32>
      %c0_12 = arith.constant 0 : index
      %c0_13 = arith.constant 0 : index
      %13 = vector.load %arg4[%c0_12, %c0_13] : memref<128x128xf32, #tpu.memory_space<vmem>>, vector<128x128xf32>
      tpu.vector_store %arg4[%c0_12, %c0_13], %12 {strides = array<i32>} : memref<128x128xf32, #tpu.memory_space<vmem>>, vector<128x128xf32>,
    } else {
    }
    return
  }
  func.func @transform_0(%arg0: i32, %arg1: i32) -> (i32, i32) {
    %c0_i32 = arith.constant 0 : i32
    return %arg0, %arg1 : i32, i32
  }
  func.func @transform_1(%arg0: i32, %arg1: i32) -> (i32, i32) {
    %c0_i32 = arith.constant 0 : i32
    %c0_i32_0 = arith.constant 0 : i32
    return %arg1, %c0_i32 : i32, i32
  }
  func.func @transform_2(%arg0: i32, %arg1: i32) -> (i32, i32) {
    %c0_i32 = arith.constant 0 : i32
    %c0_i32_0 = arith.constant 0 : i32
    return %arg0, %c0_i32 : i32, i32
  }
}

</mosaic_0001>

<llo_original>
// kernel: tpu_custom_call.1
$region0: #{tpu_custom_call.1}
  #allocation0 [shape = 'u32[]', space=smem, size = 0x4, offset = 0x4, fixed_abs, tag = 'smem constant byte address 0x4 - core index']
  #allocation1 [shape = 'u32[144,128]{1,0:T(1,128)}', space=vmem, size = 0x12000, scoped, tag = 'internal scratch']
  #allocation2 [shape = 'f32[128,128]{1,0:T(8,128)}', space=vmem, size = 0x10000, scoped, tag = 'scratch operand']
  %s0 = inlined_call_operand.hbm [shape: f32[128,128], index: 0, kind: input, shape index: {}]
  %s1 = inlined_call_operand.hbm [shape: f32[128,128], index: 1, kind: input, shape index: {}]
  %s2 = inlined_call_operand.hbm [shape: f32[128,128], index: 2, kind: output, shape index: {}]
  %s3 = sld [smem:[#allocation0]]
  $region34: #{tpu_custom_call.1} parent=0
    _
  %s5 = ssub.s32 1, %s3
  %s6 = scalar_select 0, %s5, %s3
  $region1: #{tpu_custom_call.1} parent=0
    #allocation3 [shape = 'u8[65536]{0}', space=vmem, size = 0x10000, scoped, tag = 'input window, operand 0, single buffered']
    #allocation4 [shape = 's32[1]{0}', space=sflag, size = 0x4, scoped, tag = 'scoped memory for tpu_custom_call.1']
    #allocation5 [shape = 's32[1]{0}', space=sflag, size = 0x4, scoped, tag = 'scoped memory for tpu_custom_call.1']
    #allocation6 [shape = 'u8[65536]{0}', space=vmem, size = 0x10000, scoped, tag = 'input window, operand 1, single buffered']
    #allocation7 [shape = 's32[1]{0}', space=sflag, size = 0x4, scoped, tag = 'scoped memory for tpu_custom_call.1']
    #allocation8 [shape = 'u8[65536]{0}', space=vmem, size = 0x10000, scoped, tag = 'output window, operand 0, single buffered']
    %7 = vsyncpa [#allocation4], 0
    %8 = vsyncpa [#allocation7], 0
    %9 = vsyncpa [#allocation5], 0
    // Predicated region
    $region2: #{tpu_custom_call.1} parent=1 // pred_check
      _
    $region3: #{tpu_custom_call.1} parent=1 // pred_check_branch
      %11 = sbr.rel (0) target = $region5
    $region4: #{tpu_custom_call.1} parent=1 // pred_region
      %s13 = ssub.s32 2048, 2048
      %14 = vsyncadd [#allocation4], %s13
      %s15 = sshll.u32 [#allocation3], 4
      %s16 = int_to_ptr.vmem [resolvable:$true] %s15
      %21 = dma.hbm_to_vmem [thread:$0]  %s0, 2048, %s16, [#allocation4], 128, 128, 8
    $region5: #{tpu_custom_call.1} parent=1 // pred_fallthru
      _
    // Predicated region
    $region6: #{tpu_custom_call.1} parent=1 // pred_check
      _
    $region7: #{tpu_custom_call.1} parent=1 // pred_check_branch
      %23 = sbr.rel (0) target = $region9
    $region8: #{tpu_custom_call.1} parent=1 // pred_region
      %s25 = ssub.s32 2048, 2048
      %26 = vsyncadd [#allocation7], %s25
      %s27 = sshll.u32 [#allocation6], 4
      %s28 = int_to_ptr.vmem [resolvable:$true] %s27
      %33 = dma.hbm_to_vmem [thread:$0]  %s1, 2048, %s28, [#allocation7], 128, 128, 8
    $region9: #{tpu_custom_call.1} parent=1 // pred_fallthru
      _
    // Predicated region
    $region10: #{tpu_custom_call.1} parent=1 // pred_check
      _
    $region11: #{tpu_custom_call.1} parent=1 // pred_check_branch
      %35 = sbr.rel (0) target = $region13
    $region12: #{tpu_custom_call.1} parent=1 // pred_region
      %36 = dma.done [#allocation4], 2048
    $region13: #{tpu_custom_call.1} parent=1 // pred_fallthru
      _
    // Predicated region
    $region14: #{tpu_custom_call.1} parent=1 // pred_check
      _
    $region15: #{tpu_custom_call.1} parent=1 // pred_check_branch
      %38 = sbr.rel (0) target = $region17
    $region16: #{tpu_custom_call.1} parent=1 // pred_region
      %39 = dma.done [#allocation7], 2048
    $region17: #{tpu_custom_call.1} parent=1 // pred_fallthru
      _
    %p40 = scmp.eq.s32.totalorder 0, 0
    // Predicated region
    $region18: #{tpu_custom_call.1} parent=1 // pred_check
      %p41 = pneg %p40
    $region19: #{tpu_custom_call.1} parent=1 // pred_check_branch
      %43 = sbr.rel (%p41) target = $region21
    $region20: #{tpu_custom_call.1} parent=1 // pred_region
      %44 = vst [vmem:[#allocation2] sm:$0xff] 0.0
      %45 = vst [vmem:[#allocation2 + $0x8] sm:$0xff] 0.0
      %46 = vst [vmem:[#allocation2 + $0x10] sm:$0xff] 0.0
      %47 = vst [vmem:[#allocation2 + $0x18] sm:$0xff] 0.0
      %48 = vst [vmem:[#allocation2 + $0x20] sm:$0xff] 0.0
      %49 = vst [vmem:[#allocation2 + $0x28] sm:$0xff] 0.0
      %50 = vst [vmem:[#allocation2 + $0x30] sm:$0xff] 0.0
      %51 = vst [vmem:[#allocation2 + $0x38] sm:$0xff] 0.0
      %52 = vst [vmem:[#allocation2 + $0x40] sm:$0xff] 0.0
      %53 = vst [vmem:[#allocation2 + $0x48] sm:$0xff] 0.0
      %54 = vst [vmem:[#allocation2 + $0x50] sm:$0xff] 0.0
      %55 = vst [vmem:[#allocation2 + $0x58] sm:$0xff] 0.0
      %56 = vst [vmem:[#allocation2 + $0x60] sm:$0xff] 0.0
      %57 = vst [vmem:[#allocation2 + $0x68] sm:$0xff] 0.0
      %58 = vst [vmem:[#allocation2 + $0x70] sm:$0xff] 0.0
      %59 = vst [vmem:[#allocation2 + $0x78] sm:$0xff] 0.0
    $region21: #{tpu_custom_call.1} parent=1 // pred_fallthru
      _
    %v60 = vld [vmem:[#allocation2] sm:$0xff]
    %v61 = vld [vmem:[#allocation2 + $0x8] sm:$0xff]
    %v62 = vld [vmem:[#allocation2 + $0x10] sm:$0xff]
    %v63 = vld [vmem:[#allocation2 + $0x18] sm:$0xff]
    %v64 = vld [vmem:[#allocation2 + $0x20] sm:$0xff]
    %v65 = vld [vmem:[#allocation2 + $0x28] sm:$0xff]
    %v66 = vld [vmem:[#allocation2 + $0x30] sm:$0xff]
    %v67 = vld [vmem:[#allocation2 + $0x38] sm:$0xff]
    %v68 = vld [vmem:[#allocation2 + $0x40] sm:$0xff]
    %v69 = vld [vmem:[#allocation2 + $0x48] sm:$0xff]
    %v70 = vld [vmem:[#allocation2 + $0x50] sm:$0xff]
    %v71 = vld [vmem:[#allocation2 + $0x58] sm:$0xff]
    %v72 = vld [vmem:[#allocation2 + $0x60] sm:$0xff]
    %v73 = vld [vmem:[#allocation2 + $0x68] sm:$0xff]
    %v74 = vld [vmem:[#allocation2 + $0x70] sm:$0xff]
    %v75 = vld [vmem:[#allocation2 + $0x78] sm:$0xff]
    %v76 = vld [vmem:[#allocation3] sm:$0xff]
    %v77 = vld [vmem:[#allocation3 + $0x8] sm:$0xff]
    %v78 = vld [vmem:[#allocation3 + $0x10] sm:$0xff]
    %v79 = vld [vmem:[#allocation3 + $0x18] sm:$0xff]
    %v80 = vld [vmem:[#allocation3 + $0x20] sm:$0xff]
    %v81 = vld [vmem:[#allocation3 + $0x28] sm:$0xff]
    %v82 = vld [vmem:[#allocation3 + $0x30] sm:$0xff]
    %v83 = vld [vmem:[#allocation3 + $0x38] sm:$0xff]
    %v84 = vld [vmem:[#allocation3 + $0x40] sm:$0xff]
    %v85 = vld [vmem:[#allocation3 + $0x48] sm:$0xff]
    %v86 = vld [vmem:[#allocation3 + $0x50] sm:$0xff]
    %v87 = vld [vmem:[#allocation3 + $0x58] sm:$0xff]
    %v88 = vld [vmem:[#allocation3 + $0x60] sm:$0xff]
    %v89 = vld [vmem:[#allocation3 + $0x68] sm:$0xff]
    %v90 = vld [vmem:[#allocation3 + $0x70] sm:$0xff]
    %v91 = vld [vmem:[#allocation3 + $0x78] sm:$0xff]
    %v92 = vld [vmem:[#allocation6] sm:$0xff]
    %v93 = vld [vmem:[#allocation6 + $0x8] sm:$0xff]
    %v94 = vld [vmem:[#allocation6 + $0x10] sm:$0xff]
    %v95 = vld [vmem:[#allocation6 + $0x18] sm:$0xff]
    %v96 = vld [vmem:[#allocation6 + $0x20] sm:$0xff]
    %v97 = vld [vmem:[#allocation6 + $0x28] sm:$0xff]
    %v98 = vld [vmem:[#allocation6 + $0x30] sm:$0xff]
    %v99 = vld [vmem:[#allocation6 + $0x38] sm:$0xff]
    %v100 = vld [vmem:[#allocation6 + $0x40] sm:$0xff]
    %v101 = vld [vmem:[#allocation6 + $0x48] sm:$0xff]
    %v102 = vld [vmem:[#allocation6 + $0x50] sm:$0xff]
    %v103 = vld [vmem:[#allocation6 + $0x58] sm:$0xff]
    %v104 = vld [vmem:[#allocation6 + $0x60] sm:$0xff]
    %v105 = vld [vmem:[#allocation6 + $0x68] sm:$0xff]
    %v106 = vld [vmem:[#allocation6 + $0x70] sm:$0xff]
    %v107 = vld [vmem:[#allocation6 + $0x78] sm:$0xff]
    %108 = vmatprep.subr.mxu0 0.0
    %109 = vmatpush1.msra.mxu0 %v107
    %110 = vmatprep.subr.mxu0 0.0
    %111 = vmatpush1.msra.mxu0 %v106
    %112 = vmatprep.subr.mxu0 0.0
    %113 = vmatpush1.msra.mxu0 %v105
    %114 = vmatprep.subr.mxu0 0.0
    %115 = vmatpush1.msra.mxu0 %v104
    %116 = vmatprep.subr.mxu0 0.0
    %117 = vmatpush1.msra.mxu0 %v103
    %118 = vmatprep.subr.mxu0 0.0
    %119 = vmatpush1.msra.mxu0 %v102
    %120 = vmatprep.subr.mxu0 0.0
    %121 = vmatpush1.msra.mxu0 %v101
    %122 = vmatprep.subr.mxu0 0.0
    %123 = vmatpush1.msra.mxu0 %v100
    %124 = vmatprep.subr.mxu0 0.0
    %125 = vmatpush1.msra.mxu0 %v99
    %126 = vmatprep.subr.mxu0 0.0
    %127 = vmatpush1.msra.mxu0 %v98
    %128 = vmatprep.subr.mxu0 0.0
    %129 = vmatpush1.msra.mxu0 %v97
    %130 = vmatprep.subr.mxu0 0.0
    %131 = vmatpush1.msra.mxu0 %v96
    %132 = vmatprep.subr.mxu0 0.0
    %133 = vmatpush1.msra.mxu0 %v95
    %134 = vmatprep.subr.mxu0 0.0
    %135 = vmatpush1.msra.mxu0 %v94
    %136 = vmatprep.subr.mxu0 0.0
    %137 = vmatpush1.msra.mxu0 %v93
    %138 = vmatprep.subr.mxu0 0.0
    %139 = vmatpush1.msra.mxu0 %v92
    %140 = vmatprep.subr.mxu0 0.0
    %141 = vmatpush2.msra.mxu0 0.0
    %142 = vmatprep.subr.mxu0 0.0
    %143 = vmatpush2.msra.mxu0 0.0
    %144 = vmatprep.subr.mxu0 0.0
    %145 = vmatpush2.msra.mxu0 0.0
    %146 = vmatprep.subr.mxu0 0.0
    %147 = vmatpush2.msra.mxu0 0.0
    %148 = vmatprep.subr.mxu0 0.0
    %149 = vmatpush2.msra.mxu0 0.0
    %150 = vmatprep.subr.mxu0 0.0
    %151 = vmatpush2.msra.mxu0 0.0
    %152 = vmatprep.subr.mxu0 0.0
    %153 = vmatpush2.msra.mxu0 0.0
    %154 = vmatprep.subr.mxu0 0.0
    %155 = vmatpush2.msra.mxu0 0.0
    %156 = vmatprep.subr.mxu0 0.0
    %157 = vmatpush2.msra.mxu0 0.0
    %158 = vmatprep.subr.mxu0 0.0
    %159 = vmatpush2.msra.mxu0 0.0
    %160 = vmatprep.subr.mxu0 0.0
    %161 = vmatpush2.msra.mxu0 0.0
    %162 = vmatprep.subr.mxu0 0.0
    %163 = vmatpush2.msra.mxu0 0.0
    %164 = vmatprep.subr.mxu0 0.0
    %165 = vmatpush2.msra.mxu0 0.0
    %166 = vmatprep.subr.mxu0 0.0
    %167 = vmatpush2.msra.mxu0 0.0
    %168 = vmatprep.subr.mxu0 0.0
    %169 = vmatpush2.msra.mxu0 0.0
    %170 = vmatprep.subr.mxu0 0.0
    %171 = vmatpush2.msra.mxu0 0.0
    %172 = vmatprep.mubr.f32.mxu0 0.0
    %173 = vmatmul.mubr.f32.gmra.mxu0 %v76
    %v174 = vpop.f32.mrf.mxu0
    %v175 = vadd.f32 0.0, %v174
    %v176 = vpop.f32.mrf.mxu0
    %177 = vmatprep.mubr.f32.mxu0 0.0
    %178 = vmatmul.mubr.f32.gmra.mxu0 %v77
    %v179 = vpop.f32.mrf.mxu0
    %v180 = vadd.f32 0.0, %v179
    %v181 = vpop.f32.mrf.mxu0
    %182 = vmatprep.mubr.f32.mxu0 0.0
    %183 = vmatmul.mubr.f32.gmra.mxu0 %v78
    %v184 = vpop.f32.mrf.mxu0
    %v185 = vadd.f32 0.0, %v184
    %v186 = vpop.f32.mrf.mxu0
    %187 = vmatprep.mubr.f32.mxu0 0.0
    %188 = vmatmul.mubr.f32.gmra.mxu0 %v79
    %v189 = vpop.f32.mrf.mxu0
    %v190 = vadd.f32 0.0, %v189
    %v191 = vpop.f32.mrf.mxu0
    %192 = vmatprep.mubr.f32.mxu0 0.0
    %193 = vmatmul.mubr.f32.gmra.mxu0 %v80
    %v194 = vpop.f32.mrf.mxu0
    %v195 = vadd.f32 0.0, %v194
    %v196 = vpop.f32.mrf.mxu0
    %197 = vmatprep.mubr.f32.mxu0 0.0
    %198 = vmatmul.mubr.f32.gmra.mxu0 %v81
    %v199 = vpop.f32.mrf.mxu0
    %v200 = vadd.f32 0.0, %v199
    %v201 = vpop.f32.mrf.mxu0
    %202 = vmatprep.mubr.f32.mxu0 0.0
    %203 = vmatmul.mubr.f32.gmra.mxu0 %v82
    %v204 = vpop.f32.mrf.mxu0
    %v205 = vadd.f32 0.0, %v204
    %v206 = vpop.f32.mrf.mxu0
    %207 = vmatprep.mubr.f32.mxu0 0.0
    %208 = vmatmul.mubr.f32.gmra.mxu0 %v83
    %v209 = vpop.f32.mrf.mxu0
    %v210 = vadd.f32 0.0, %v209
    %v211 = vpop.f32.mrf.mxu0
    %212 = vmatprep.mubr.f32.mxu0 0.0
    %213 = vmatmul.mubr.f32.gmra.mxu0 %v84
    %v214 = vpop.f32.mrf.mxu0
    %v215 = vadd.f32 0.0, %v214
    %v216 = vpop.f32.mrf.mxu0
    %217 = vmatprep.mubr.f32.mxu0 0.0
    %218 = vmatmul.mubr.f32.gmra.mxu0 %v85
    %v219 = vpop.f32.mrf.mxu0
    %v220 = vadd.f32 0.0, %v219
    %v221 = vpop.f32.mrf.mxu0
    %222 = vmatprep.mubr.f32.mxu0 0.0
    %223 = vmatmul.mubr.f32.gmra.mxu0 %v86
    %v224 = vpop.f32.mrf.mxu0
    %v225 = vadd.f32 0.0, %v224
    %v226 = vpop.f32.mrf.mxu0
    %227 = vmatprep.mubr.f32.mxu0 0.0
    %228 = vmatmul.mubr.f32.gmra.mxu0 %v87
    %v229 = vpop.f32.mrf.mxu0
    %v230 = vadd.f32 0.0, %v229
    %v231 = vpop.f32.mrf.mxu0
    %232 = vmatprep.mubr.f32.mxu0 0.0
    %233 = vmatmul.mubr.f32.gmra.mxu0 %v88
    %v234 = vpop.f32.mrf.mxu0
    %v235 = vadd.f32 0.0, %v234
    %v236 = vpop.f32.mrf.mxu0
    %237 = vmatprep.mubr.f32.mxu0 0.0
    %238 = vmatmul.mubr.f32.gmra.mxu0 %v89
    %v239 = vpop.f32.mrf.mxu0
    %v240 = vadd.f32 0.0, %v239
    %v241 = vpop.f32.mrf.mxu0
    %242 = vmatprep.mubr.f32.mxu0 0.0
    %243 = vmatmul.mubr.f32.gmra.mxu0 %v90
    %v244 = vpop.f32.mrf.mxu0
    %v245 = vadd.f32 0.0, %v244
    %v246 = vpop.f32.mrf.mxu0
    %247 = vmatprep.mubr.f32.mxu0 0.0
    %248 = vmatmul.mubr.f32.gmra.mxu0 %v91
    %v249 = vpop.f32.mrf.mxu0
    %v250 = vadd.f32 0.0, %v249
    %v251 = vpop.f32.mrf.mxu0
    %252 = vdwg.mxu0
    %v253 = vadd.f32 %v60, %v175
    %v254 = vadd.f32 %v61, %v180
    %v255 = vadd.f32 %v62, %v185
    %v256 = vadd.f32 %v63, %v190
    %v257 = vadd.f32 %v64, %v195
    %v258 = vadd.f32 %v65, %v200
    %v259 = vadd.f32 %v66, %v205
    %v260 = vadd.f32 %v67, %v210
    %v261 = vadd.f32 %v68, %v215
    %v262 = vadd.f32 %v69, %v220
    %v263 = vadd.f32 %v70, %v225
    %v264 = vadd.f32 %v71, %v230
    %v265 = vadd.f32 %v72, %v235
    %v266 = vadd.f32 %v73, %v240
    %v267 = vadd.f32 %v74, %v245
    %v268 = vadd.f32 %v75, %v250
    %269 = vst [vmem:[#allocation2] sm:$0xff] %v253
    %270 = vst [vmem:[#allocation2 + $0x8] sm:$0xff] %v254
    %271 = vst [vmem:[#allocation2 + $0x10] sm:$0xff] %v255
    %272 = vst [vmem:[#allocation2 + $0x18] sm:$0xff] %v256
    %273 = vst [vmem:[#allocation2 + $0x20] sm:$0xff] %v257
    %274 = vst [vmem:[#allocation2 + $0x28] sm:$0xff] %v258
    %275 = vst [vmem:[#allocation2 + $0x30] sm:$0xff] %v259
    %276 = vst [vmem:[#allocation2 + $0x38] sm:$0xff] %v260
    %277 = vst [vmem:[#allocation2 + $0x40] sm:$0xff] %v261
    %278 = vst [vmem:[#allocation2 + $0x48] sm:$0xff] %v262
    %279 = vst [vmem:[#allocation2 + $0x50] sm:$0xff] %v263
    %280 = vst [vmem:[#allocation2 + $0x58] sm:$0xff] %v264
    %281 = vst [vmem:[#allocation2 + $0x60] sm:$0xff] %v265
    %282 = vst [vmem:[#allocation2 + $0x68] sm:$0xff] %v266
    %283 = vst [vmem:[#allocation2 + $0x70] sm:$0xff] %v267
    %284 = vst [vmem:[#allocation2 + $0x78] sm:$0xff] %v268
    // Predicated region
    $region22: #{tpu_custom_call.1} parent=1 // pred_check
      %p285 = pneg %p40
    $region23: #{tpu_custom_call.1} parent=1 // pred_check_branch
      %287 = sbr.rel (%p285) target = $region25
    $region24: #{tpu_custom_call.1} parent=1 // pred_region
      %v288 = vld [vmem:[#allocation2] sm:$0xff]
      %v289 = vld [vmem:[#allocation2 + $0x8] sm:$0xff]
      %v290 = vld [vmem:[#allocation2 + $0x10] sm:$0xff]
      %v291 = vld [vmem:[#allocation2 + $0x18] sm:$0xff]
      %v292 = vld [vmem:[#allocation2 + $0x20] sm:$0xff]
      %v293 = vld [vmem:[#allocation2 + $0x28] sm:$0xff]
      %v294 = vld [vmem:[#allocation2 + $0x30] sm:$0xff]
      %v295 = vld [vmem:[#allocation2 + $0x38] sm:$0xff]
      %v296 = vld [vmem:[#allocation2 + $0x40] sm:$0xff]
      %v297 = vld [vmem:[#allocation2 + $0x48] sm:$0xff]
      %v298 = vld [vmem:[#allocation2 + $0x50] sm:$0xff]
      %v299 = vld [vmem:[#allocation2 + $0x58] sm:$0xff]
      %v300 = vld [vmem:[#allocation2 + $0x60] sm:$0xff]
      %v301 = vld [vmem:[#allocation2 + $0x68] sm:$0xff]
      %v302 = vld [vmem:[#allocation2 + $0x70] sm:$0xff]
      %v303 = vld [vmem:[#allocation2 + $0x78] sm:$0xff]
      %304 = vst [vmem:[#allocation8] sm:$0xff] %v288
      %305 = vst [vmem:[#allocation8 + $0x8] sm:$0xff] %v289
      %306 = vst [vmem:[#allocation8 + $0x10] sm:$0xff] %v290
      %307 = vst [vmem:[#allocation8 + $0x18] sm:$0xff] %v291
      %308 = vst [vmem:[#allocation8 + $0x20] sm:$0xff] %v292
      %309 = vst [vmem:[#allocation8 + $0x28] sm:$0xff] %v293
      %310 = vst [vmem:[#allocation8 + $0x30] sm:$0xff] %v294
      %311 = vst [vmem:[#allocation8 + $0x38] sm:$0xff] %v295
      %312 = vst [vmem:[#allocation8 + $0x40] sm:$0xff] %v296
      %313 = vst [vmem:[#allocation8 + $0x48] sm:$0xff] %v297
      %314 = vst [vmem:[#allocation8 + $0x50] sm:$0xff] %v298
      %315 = vst [vmem:[#allocation8 + $0x58] sm:$0xff] %v299
      %316 = vst [vmem:[#allocation8 + $0x60] sm:$0xff] %v300
      %317 = vst [vmem:[#allocation8 + $0x68] sm:$0xff] %v301
      %318 = vst [vmem:[#allocation8 + $0x70] sm:$0xff] %v302
      %319 = vst [vmem:[#allocation8 + $0x78] sm:$0xff] %v303
    $region25: #{tpu_custom_call.1} parent=1 // pred_fallthru
      _
    // Predicated region
    $region26: #{tpu_custom_call.1} parent=1 // pred_check
      _
    $region27: #{tpu_custom_call.1} parent=1 // pred_check_branch
      %321 = sbr.rel (0) target = $region29
    $region28: #{tpu_custom_call.1} parent=1 // pred_region
      %s323 = ssub.s32 2048, 2048
      %324 = vsyncadd [#allocation5], %s323
      %s325 = sshll.u32 [#allocation8], 4
      %s326 = int_to_ptr.vmem [resolvable:$true] %s325
      %331 = dma.vmem_to_hbm [thread:$0]  %s326, 2048, %s2, [#allocation5], 128, 128, 8
    $region29: #{tpu_custom_call.1} parent=1 // pred_fallthru
      _
    // Predicated region
    $region30: #{tpu_custom_call.1} parent=1 // pred_check
      _
    $region31: #{tpu_custom_call.1} parent=1 // pred_check_branch
      %333 = sbr.rel (0) target = $region33
    $region32: #{tpu_custom_call.1} parent=1 // pred_region
      %334 = dma.done [#allocation5], 2048
    $region33: #{tpu_custom_call.1} parent=1 // pred_fallthru
      _
    %335 = vsyncpa [#allocation4], 1
    %336 = vsyncpa [#allocation7], 1
    %337 = vsyncpa [#allocation5], 1

</llo_original>
